<compile_context>
chip_gen: v5e
topology: v5e:2x2
jax: 0.10.0
libtpu: 0.0.40
codegen_flags: <defaults>
</compile_context>

<pallas_src>
import functools

import jax
import jax.numpy as jnp
from jax.experimental import pallas as pl
from jax.experimental.pallas import tpu as pltpu

_LANE = 128
# Explicit scoped-VMEM request (v5e default is 16 MiB; v6e/v7x default 32 MiB;
# all generations have >= 64 MiB physical, so 32 MiB is safe everywhere).
_VMEM_LIMIT = 32 * 1024 * 1024
# Working-set budget for the fused single-pass path (in/out double buffers +
# a few f32 slab temporaries must fit comfortably under _VMEM_LIMIT).
_FUSED_BUDGET = 20 * 1024 * 1024


# ----------------------------------------------------------------------------
# Tiling helpers
# ----------------------------------------------------------------------------
def _sublane_unit(dtype):
    """Sublane tile unit: 8 for 4-byte, 16 for 2-byte, 32 for 1-byte dtypes."""
    return max(8, 32 // jnp.dtype(dtype).itemsize)


def _pick_tile(dim, unit, cap):
    """Largest multiple-of-`unit` divisor of `dim` that is <= cap, else `dim`
    (a full-extent block is always a legal block size)."""
    t = min(cap, dim)
    t -= t % unit
    while t >= unit:
        if dim % t == 0:
            return t
        t -= unit
    # TODO(synk): for awkward dims this falls back to a full-extent block; a
    # cdiv grid + masked tail would keep VMEM bounded for arbitrary shapes.
    return dim


def _pick_fused_channel_tile(C, unit, per_channel_bytes, budget):
    """Channel tile for the fused path: largest legal divisor of C whose
    per-step working set fits `budget`; prefers >= 2 channel tiles so the
    'parallel' grid axis can split across the two TensorCores on v7x."""
    cands = {d for d in range(unit, C + 1, unit) if C % d == 0}
    cands.add(C)  # full extent is always a legal block size
    fitting = sorted((d for d in cands if d * per_channel_bytes <= budget),
                     reverse=True)
    if not fitting:
        return None
    multi = [d for d in fitting if C // d >= 2]
    return multi[0] if multi else fitting[0]


def _compiler_params(semantics):
    return pltpu.CompilerParams(dimension_semantics=semantics,
                                vmem_limit_bytes=_VMEM_LIMIT)


# ----------------------------------------------------------------------------
# FUSED single-pass kernels: one channel-tile slab resident per grid step,
# stats + normalize computed together (1 HBM read + 1 HBM write).
# ----------------------------------------------------------------------------
def _fused_nchw_kernel(x_ref, g_ref, b_ref, y_ref, mean_ref, var_ref, *,
                       count, eps):
    x = x_ref[...].astype(jnp.float32)                       # (N, TC, HW)
    xs = jnp.sum(x, axis=0)                                  # (TC, HW) VALU adds
    mean = jnp.sum(xs, axis=1, keepdims=True) * (1.0 / count)  # (TC, 1)
    xc = x - mean[None]                                      # centered slab
    vs = jnp.sum(xc * xc, axis=0)                            # (TC, HW)
    var = jnp.sum(vs, axis=1, keepdims=True) * (1.0 / count)   # (TC, 1)
    scale = g_ref[...] / jnp.sqrt(var + eps)                 # (TC, 1) f32
    y_ref[...] = (xc * scale[None] + b_ref[...][None]).astype(y_ref.dtype)
    mean_ref[...] = mean
    var_ref[...] = var


def _fused_nchw(x3, gamma, beta, tc, eps):
    N, C, HW = x3.shape
    kernel = functools.partial(_fused_nchw_kernel,
                               count=float(N * HW), eps=float(eps))
    return pl.pallas_call(
        kernel,
        out_shape=(jax.ShapeDtypeStruct((N, C, HW), x3.dtype),
                   jax.ShapeDtypeStruct((C, 1), jnp.float32),
                   jax.ShapeDtypeStruct((C, 1), jnp.float32)),
        grid=(C // tc,),
        in_specs=[pl.BlockSpec((N, tc, HW), lambda c: (0, c, 0)),
                  pl.BlockSpec((tc, 1), lambda c: (c, 0)),
                  pl.BlockSpec((tc, 1), lambda c: (c, 0))],
        out_specs=(pl.BlockSpec((N, tc, HW), lambda c: (0, c, 0)),
                   pl.BlockSpec((tc, 1), lambda c: (c, 0)),
                   pl.BlockSpec((tc, 1), lambda c: (c, 0))),
        compiler_params=_compiler_params(("parallel",)),
    )(x3, gamma, beta)


def _fused_2d_kernel(x_ref, g_ref, b_ref, y_ref, mean_ref, var_ref, *,
                     count, eps):
    x = x_ref[...].astype(jnp.float32)                       # (N, TCl)
    mean = jnp.sum(x, axis=0, keepdims=True) * (1.0 / count)   # (1, TCl)
    xc = x - mean
    var = jnp.sum(xc * xc, axis=0, keepdims=True) * (1.0 / count)
    scale = g_ref[...] / jnp.sqrt(var + eps)                  # (1, TCl)
    y_ref[...] = (xc * scale + b_ref[...]).astype(y_ref.dtype)
    mean_ref[...] = mean
    var_ref[...] = var


def _fused_2d(x, gamma, beta, tcl, eps):
    N, C = x.shape
    kernel = functools.partial(_fused_2d_kernel, count=float(N), eps=float(eps))
    return pl.pallas_call(
        kernel,
        out_shape=(jax.ShapeDtypeStruct((N, C), x.dtype),
                   jax.ShapeDtypeStruct((1, C), jnp.float32),
                   jax.ShapeDtypeStruct((1, C), jnp.float32)),
        grid=(C // tcl,),
        in_specs=[pl.BlockSpec((N, tcl), lambda c: (0, c)),
                  pl.BlockSpec((1, tcl), lambda c: (0, c)),
                  pl.BlockSpec((1, tcl), lambda c: (0, c))],
        out_specs=(pl.BlockSpec((N, tcl), lambda c: (0, c)),
                   pl.BlockSpec((1, tcl), lambda c: (0, c)),
                   pl.BlockSpec((1, tcl), lambda c: (0, c))),
        compiler_params=_compiler_params(("parallel",)),
    )(x, gamma, beta)


# ----------------------------------------------------------------------------
# Two-pass fallback, 4D path: x laid out as (N, C, HW); lane-dense (C, w)
# partial-sum accumulators, final lane reduce in the wrapper.
# ----------------------------------------------------------------------------
def _stats_nchw_kernel(x_ref, sum_ref, sq_ref, *, n_chunks):
    # grid = (c_tiles, N, hw_tiles); (N, hw) are reduction ("arbitrary") axes.
    @pl.when((pl.program_id(1) == 0) & (pl.program_id(2) == 0))
    def _():
        sum_ref[...] = jnp.zeros_like(sum_ref)
        sq_ref[...] = jnp.zeros_like(sq_ref)

    x = x_ref[0].astype(jnp.float32)                  # (TC, TM)
    w = x.shape[1] // n_chunks
    s = x[:, :w]
    q = s * s
    for k in range(1, n_chunks):                      # static unroll; VALU only
        c = x[:, k * w:(k + 1) * w]
        s = s + c
        q = q + c * c
    sum_ref[...] += s                                  # lane-dense accumulator
    sq_ref[...] += q


def _stats_nchw(x3, tc, tm):
    N, C, HW = x3.shape
    n_chunks = tm // _LANE if tm % _LANE == 0 else 1
    w = tm // n_chunks
    kernel = functools.partial(_stats_nchw_kernel, n_chunks=n_chunks)
    return pl.pallas_call(
        kernel,
        out_shape=(jax.ShapeDtypeStruct((C, w), jnp.float32),
                   jax.ShapeDtypeStruct((C, w), jnp.float32)),
        grid=(C // tc, N, HW // tm),
        in_specs=[pl.BlockSpec((1, tc, tm), lambda c, n, m: (n, c, m))],
        out_specs=(pl.BlockSpec((tc, w), lambda c, n, m: (c, 0)),
                   pl.BlockSpec((tc, w), lambda c, n, m: (c, 0))),
        compiler_params=_compiler_params(("parallel", "arbitrary", "arbitrary")),
    )(x3)


def _affine_nchw_kernel(x_ref, scale_ref, shift_ref, y_ref):
    x = x_ref[0].astype(jnp.float32)                  # (TC, TM)
    y_ref[...] = (x * scale_ref[...] + shift_ref[...])[None].astype(y_ref.dtype)


def _affine_nchw(x3, scale, shift, tc, tm):
    N, C, HW = x3.shape
    return pl.pallas_call(
        _affine_nchw_kernel,
        out_shape=jax.ShapeDtypeStruct((N, C, HW), x3.dtype),
        grid=(C // tc, N, HW // tm),
        in_specs=[pl.BlockSpec((1, tc, tm), lambda c, n, m: (n, c, m)),
                  pl.BlockSpec((tc, 1), lambda c, n, m: (c, 0)),
                  pl.BlockSpec((tc, 1), lambda c, n, m: (c, 0))],
        out_specs=pl.BlockSpec((1, tc, tm), lambda c, n, m: (n, c, m)),
        compiler_params=_compiler_params(("parallel", "parallel", "parallel")),
    )(x3, scale, shift)


# ----------------------------------------------------------------------------
# Two-pass fallback, 2D path: x is (N, C), C on lanes (lane-dense accumulator).
# ----------------------------------------------------------------------------
def _stats_2d_kernel(x_ref, sum_ref, sq_ref):
    @pl.when(pl.program_id(1) == 0)
    def _():
        sum_ref[...] = jnp.zeros_like(sum_ref)
        sq_ref[...] = jnp.zeros_like(sq_ref)

    x = x_ref[...].astype(jnp.float32)                 # (TN, TCl)
    sum_ref[...] += jnp.sum(x, axis=0, keepdims=True)  # lane-dense (1, TCl)
    sq_ref[...] += jnp.sum(x * x, axis=0, keepdims=True)


def _stats_2d(x, tn, tcl):
    N, C = x.shape
    return pl.pallas_call(
        _stats_2d_kernel,
        out_shape=(jax.ShapeDtypeStruct((1, C), jnp.float32),
                   jax.ShapeDtypeStruct((1, C), jnp.float32)),
        grid=(C // tcl, N // tn),
        in_specs=[pl.BlockSpec((tn, tcl), lambda c, n: (n, c))],
        out_specs=(pl.BlockSpec((1, tcl), lambda c, n: (0, c)),
                   pl.BlockSpec((1, tcl), lambda c, n: (0, c))),
        compiler_params=_compiler_params(("parallel", "arbitrary")),
    )(x)


def _affine_2d_kernel(x_ref, scale_ref, shift_ref, y_ref):
    x = x_ref[...].astype(jnp.float32)
    y_ref[...] = (x * scale_ref[...] + shift_ref[...]).astype(y_ref.dtype)


def _affine_2d(x, scale, shift, tn, tcl):
    N, C = x.shape
    return pl.pallas_call(
        _affine_2d_kernel,
        out_shape=jax.ShapeDtypeStruct((N, C), x.dtype),
        grid=(C // tcl, N // tn),
        in_specs=[pl.BlockSpec((tn, tcl), lambda c, n: (n, c)),
                  pl.BlockSpec((1, tcl), lambda c, n: (0, c)),
                  pl.BlockSpec((1, tcl), lambda c, n: (0, c))],
        out_specs=pl.BlockSpec((tn, tcl), lambda c, n: (n, c)),
        compiler_params=_compiler_params(("parallel", "parallel")),
    )(x, scale, shift)


# ----------------------------------------------------------------------------
# Wrapper (training-mode forward, matching the PyTorch reference)
# ----------------------------------------------------------------------------
def batch_norm_forward(x, gamma, beta, moving_mean, moving_var,
                       eps=1e-5, momentum=0.1, force_two_pass=False):
    """x: (N, C) or (N, C, H, W); params/stats: (1, C) or (1, C, 1, 1)."""
    assert x.ndim in (2, 4)
    itemsize = jnp.dtype(x.dtype).itemsize
    sub = _sublane_unit(x.dtype)
    # Per-element fused working set: in + out double-buffered plus ~4 f32
    # slab temporaries inside the kernel.
    fused_bytes_per_elem = 4 * itemsize + 16

    if x.ndim == 4:
        N, C, H, W = x.shape
        HW = H * W
        x3 = x.reshape(N, C, HW)                       # free, layout-preserving
        g = gamma.reshape(C, 1).astype(jnp.float32)
        b = beta.reshape(C, 1).astype(jnp.float32)

        tc_fused = None if force_two_pass else _pick_fused_channel_tile(
            C, sub, N * HW * fused_bytes_per_elem, _FUSED_BUDGET)

        if tc_fused is not None:
            y3, mean, var = _fused_nchw(x3, g, b, tc_fused, eps)  # (C,1) stats
        else:
            tc = _pick_tile(C, sub, 64)
            tm = _pick_tile(HW, _LANE, 8192)
            s_p, q_p = _stats_nchw(x3, tc, tm)         # (C, w) lane-dense partials
            count = float(N * HW)
            mean = jnp.sum(s_p, axis=1, keepdims=True) / count
            # TODO(synk): E[x^2]-mean^2 loses precision when |mean| >> std; a
            # shifted sum-of-squares would be more robust on this fallback path.
            var = jnp.maximum(
                jnp.sum(q_p, axis=1, keepdims=True) / count - mean * mean, 0.0)
            scale = g / jnp.sqrt(var + eps)
            shift = b - mean * scale
            y3 = _affine_nchw(x3, scale, shift, tc, tm)

        y = y3.reshape(N, C, H, W)
        mm = moving_mean.reshape(C, 1).astype(jnp.float32)
        mv = moving_var.reshape(C, 1).astype(jnp.float32)
        new_mm = (1.0 - momentum) * mm + momentum * mean
        new_mv = (1.0 - momentum) * mv + momentum * var
        return (y,
                new_mm.reshape(1, C, 1, 1).astype(moving_mean.dtype),
                new_mv.reshape(1, C, 1, 1).astype(moving_var.dtype))
    else:
        N, C = x.shape
        g = gamma.reshape(1, C).astype(jnp.float32)
        b = beta.reshape(1, C).astype(jnp.float32)

        tcl_fused = None if force_two_pass else _pick_fused_channel_tile(
            C, _LANE, N * fused_bytes_per_elem, _FUSED_BUDGET)

        if tcl_fused is not None:
            y, mean, var = _fused_2d(x, g, b, tcl_fused, eps)     # (1,C) stats
        else:
            tn = _pick_tile(N, sub, 512)
            tcl = _pick_tile(C, _LANE, 2048)
            s_p, q_p = _stats_2d(x, tn, tcl)           # (1, C)
            count = float(N)
            mean = s_p / count
            var = jnp.maximum(q_p / count - mean * mean, 0.0)
            scale = g / jnp.sqrt(var + eps)
            shift = b - mean * scale
            y = _affine_2d(x, scale, shift, tn, tcl)

        mm = moving_mean.reshape(1, C).astype(jnp.float32)
        mv = moving_var.reshape(1, C).astype(jnp.float32)
        new_mm = (1.0 - momentum) * mm + momentum * mean
        new_mv = (1.0 - momentum) * mv + momentum * var
        return (y,
                new_mm.astype(moving_mean.dtype),
                new_mv.astype(moving_var.dtype))


class BatchNorm:
    """JAX/Pallas counterpart of the PyTorch BatchNorm module (training mode)."""

    def __init__(self, num_features, num_dims):
        shape = (1, num_features) if num_dims == 2 else (1, num_features, 1, 1)
        self.gamma = jnp.ones(shape, dtype=jnp.float32)
        self.beta = jnp.zeros(shape, dtype=jnp.float32)
        self.moving_mean = jnp.zeros(shape, dtype=jnp.float32)
        self.moving_var = jnp.ones(shape, dtype=jnp.float32)

    def __call__(self, x):
        y, self.moving_mean, self.moving_var = batch_norm_forward(
            x, self.gamma, self.beta, self.moving_mean, self.moving_var,
            eps=1e-5, momentum=0.1)
        return y


# ----------------------------------------------------------------------------
# Self-test
# ----------------------------------------------------------------------------
def _ref_bn(x, gamma, beta, mm, mv, eps=1e-5, momentum=0.1):
    axes = (0, 2, 3) if x.ndim == 4 else (0,)
    mean = x.mean(axis=axes, keepdims=True)
    var = ((x - mean) ** 2).mean(axis=axes, keepdims=True)
    y = gamma * (x - mean) / jnp.sqrt(var + eps) + beta
    return y, (1.0 - momentum) * mm + momentum * mean, \
           (1.0 - momentum) * mv + momentum * var


if __name__ == "__main__":
    key = jax.random.PRNGKey(0)
    k4, k2, k4b, k2b = jax.random.split(key, 4)

    # ---- 4D (NCHW) case: fused single-pass path ----
    N, C, H, W = 2, 4, 16, 16
    x = jax.random.normal(k4, (N, C, H, W), dtype=jnp.float32)
    bn = BatchNorm(num_features=C, num_dims=4)
    y = jax.block_until_ready(bn(x))
    y_ref, mm_ref, mv_ref = _ref_bn(x, bn.gamma, bn.beta,
                                    jnp.zeros((1, C, 1, 1)), jnp.ones((1, C, 1, 1)))
    assert jnp.allclose(y, y_ref, atol=1e-5, rtol=1e-5)
    assert jnp.allclose(bn.moving_mean, mm_ref, atol=1e-5, rtol=1e-5)
    assert jnp.allclose(bn.moving_var, mv_ref, atol=1e-5, rtol=1e-5)

    # ---- 2D (N, C) case: fused single-pass path ----
    N2, C2 = 8, 4
    x2 = jax.random.normal(k2, (N2, C2), dtype=jnp.float32)
    bn2 = BatchNorm(num_features=C2, num_dims=2)
    y2 = jax.block_until_ready(bn2(x2))
    y2_ref, mm2_ref, mv2_ref = _ref_bn(x2, bn2.gamma, bn2.beta,
                                       jnp.zeros((1, C2)), jnp.ones((1, C2)))
    assert jnp.allclose(y2, y2_ref, atol=1e-5, rtol=1e-5)
    assert jnp.allclose(bn2.moving_mean, mm2_ref, atol=1e-5, rtol=1e-5)
    assert jnp.allclose(bn2.moving_var, mv2_ref, atol=1e-5, rtol=1e-5)

    # ---- 4D case, forced two-pass fallback (lane-dense accumulator path) ----
    N3, C3, H3, W3 = 2, 8, 16, 16
    x3 = jax.random.normal(k4b, (N3, C3, H3, W3), dtype=jnp.float32)
    g3 = jnp.ones((1, C3, 1, 1)); b3 = jnp.zeros((1, C3, 1, 1))
    mm3 = jnp.zeros((1, C3, 1, 1)); mv3 = jnp.ones((1, C3, 1, 1))
    y3, nmm3, nmv3 = batch_norm_forward(x3, g3, b3, mm3, mv3,
                                        force_two_pass=True)
    y3 = jax.block_until_ready(y3)
    y3_ref, mm3_ref, mv3_ref = _ref_bn(x3, g3, b3, mm3, mv3)
    assert jnp.allclose(y3, y3_ref, atol=1e-5, rtol=1e-5)
    assert jnp.allclose(nmm3, mm3_ref, atol=1e-5, rtol=1e-5)
    assert jnp.allclose(nmv3, mv3_ref, atol=1e-5, rtol=1e-5)

    # ---- 2D case, forced two-pass fallback ----
    N4, C4 = 16, 8
    x4 = jax.random.normal(k2b, (N4, C4), dtype=jnp.float32)
    g4 = jnp.ones((1, C4)); b4 = jnp.zeros((1, C4))
    mm4 = jnp.zeros((1, C4)); mv4 = jnp.ones((1, C4))
    y4, nmm4, nmv4 = batch_norm_forward(x4, g4, b4, mm4, mv4,
                                        force_two_pass=True)
    y4 = jax.block_until_ready(y4)
    y4_ref, mm4_ref, mv4_ref = _ref_bn(x4, g4, b4, mm4, mv4)
    assert jnp.allclose(y4, y4_ref, atol=1e-5, rtol=1e-5)
    assert jnp.allclose(nmm4, mm4_ref, atol=1e-5, rtol=1e-5)
    assert jnp.allclose(nmv4, mv4_ref, atol=1e-5, rtol=1e-5)

    print("KERNEL_OK")
</pallas_src>

<mosaic_0001>
module attributes {stable_mosaic.version = 11 : i64} {
  func.func @_fused_nchw_kernel(%arg0: i32, %arg1: memref<2x4x256xf32, #tpu.memory_space<vmem>>, %arg2: memref<4x1xf32, #tpu.memory_space<vmem>>, %arg3: memref<4x1xf32, #tpu.memory_space<vmem>>, %arg4: memref<2x4x256xf32, #tpu.memory_space<vmem>>, %arg5: memref<4x1xf32, #tpu.memory_space<vmem>>, %arg6: memref<4x1xf32, #tpu.memory_space<vmem>>) attributes {dimension_semantics = [#tpu.dimension_semantics<parallel>], iteration_bounds = array<i64: 1>, scalar_prefetch = 0 : i64, scratch_operands = 0 : i64, tpu.core_type = #tpu.core_type<tc>, window_params = [{transform_indices = @transform_0, window_bounds = array<i64: 2, 4, 256>}, {transform_indices = @transform_1, window_bounds = array<i64: 4, 1>}, {transform_indices = @transform_2, window_bounds = array<i64: 4, 1>}, {transform_indices = @transform_3, window_bounds = array<i64: 2, 4, 256>}, {transform_indices = @transform_4, window_bounds = array<i64: 4, 1>}, {transform_indices = @transform_5, window_bounds = array<i64: 4, 1>}]} {
    %c0 = arith.constant 0 : index
    %c0_0 = arith.constant 0 : index
    %c0_1 = arith.constant 0 : index
    %0 = vector.load %arg1[%c0, %c0_0, %c0_1] : memref<2x4x256xf32, #tpu.memory_space<vmem>>, vector<2x4x256xf32>
    %cst = arith.constant dense<0.000000e+00> : vector<4x256xf32>
    %1 = vector.multi_reduction <add>, %0, %cst [0] : vector<2x4x256xf32> to vector<4x256xf32>
    %cst_2 = arith.constant dense<0.000000e+00> : vector<4xf32>
    %2 = vector.multi_reduction <add>, %1, %cst_2 [1] : vector<4x256xf32> to vector<4xf32>
    %3 = vector.shape_cast %2 : vector<4xf32> to vector<4x1xf32>
    %cst_3 = arith.constant 0.001953125 : f32
    %4 = vector.broadcast %cst_3 : f32 to vector<4x1xf32>
    %5 = arith.mulf %3, %4 : vector<4x1xf32>
    %6 = vector.shape_cast %5 : vector<4x1xf32> to vector<1x4x1xf32>
    %7 = vector.broadcast %6 : vector<1x4x1xf32> to vector<2x4x256xf32>
    %8 = arith.subf %0, %7 : vector<2x4x256xf32>
    %9 = arith.mulf %8, %8 : vector<2x4x256xf32>
    %cst_4 = arith.constant dense<0.000000e+00> : vector<4x256xf32>
    %10 = vector.multi_reduction <add>, %9, %cst_4 [0] : vector<2x4x256xf32> to vector<4x256xf32>
    %cst_5 = arith.constant dense<0.000000e+00> : vector<4xf32>
    %11 = vector.multi_reduction <add>, %10, %cst_5 [1] : vector<4x256xf32> to vector<4xf32>
    %12 = vector.shape_cast %11 : vector<4xf32> to vector<4x1xf32>
    %cst_6 = arith.constant 0.001953125 : f32
    %13 = vector.broadcast %cst_6 : f32 to vector<4x1xf32>
    %14 = arith.mulf %12, %13 : vector<4x1xf32>
    %c0_7 = arith.constant 0 : index
    %c0_8 = arith.constant 0 : index
    %15 = vector.load %arg2[%c0_7, %c0_8] : memref<4x1xf32, #tpu.memory_space<vmem>>, vector<4x1xf32>
    %cst_9 = arith.constant 9.99999974E-6 : f32
    %16 = vector.broadcast %cst_9 : f32 to vector<4x1xf32>
    %17 = arith.addf %14, %16 : vector<4x1xf32>
    %18 = math.sqrt %17 : vector<4x1xf32>
    %19 = arith.divf %15, %18 : vector<4x1xf32>
    %20 = vector.shape_cast %19 : vector<4x1xf32> to vector<1x4x1xf32>
    %21 = vector.broadcast %20 : vector<1x4x1xf32> to vector<2x4x256xf32>
    %22 = arith.mulf %8, %21 : vector<2x4x256xf32>
    %c0_10 = arith.constant 0 : index
    %c0_11 = arith.constant 0 : index
    %23 = vector.load %arg3[%c0_10, %c0_11] : memref<4x1xf32, #tpu.memory_space<vmem>>, vector<4x1xf32>
    %24 = vector.shape_cast %23 : vector<4x1xf32> to vector<1x4x1xf32>
    %25 = vector.broadcast %24 : vector<1x4x1xf32> to vector<2x4x256xf32>
    %26 = arith.addf %22, %25 : vector<2x4x256xf32>
    %c0_12 = arith.constant 0 : index
    %c0_13 = arith.constant 0 : index
    %c0_14 = arith.constant 0 : index
    %27 = vector.load %arg4[%c0_12, %c0_13, %c0_14] : memref<2x4x256xf32, #tpu.memory_space<vmem>>, vector<2x4x256xf32>
    tpu.vector_store %arg4[%c0_12, %c0_13, %c0_14], %26 {strides = array<i32>} : memref<2x4x256xf32, #tpu.memory_space<vmem>>, vector<2x4x256xf32>,
    %c0_15 = arith.constant 0 : index
    %c0_16 = arith.constant 0 : index
    %28 = vector.load %arg5[%c0_15, %c0_16] : memref<4x1xf32, #tpu.memory_space<vmem>>, vector<4x1xf32>
    tpu.vector_store %arg5[%c0_15, %c0_16], %5 {strides = array<i32>} : memref<4x1xf32, #tpu.memory_space<vmem>>, vector<4x1xf32>,
    %c0_17 = arith.constant 0 : index
    %c0_18 = arith.constant 0 : index
    %29 = vector.load %arg6[%c0_17, %c0_18] : memref<4x1xf32, #tpu.memory_space<vmem>>, vector<4x1xf32>
    tpu.vector_store %arg6[%c0_17, %c0_18], %14 {strides = array<i32>} : memref<4x1xf32, #tpu.memory_space<vmem>>, vector<4x1xf32>,
    return
  }
  func.func @transform_0(%arg0: i32) -> (i32, i32, i32) {
    %c0_i32 = arith.constant 0 : i32
    %c0_i32_0 = arith.constant 0 : i32
    %c0_i32_1 = arith.constant 0 : i32
    return %c0_i32, %arg0, %c0_i32_0 : i32, i32, i32
  }
  func.func @transform_1(%arg0: i32) -> (i32, i32) {
    %c0_i32 = arith.constant 0 : i32
    %c0_i32_0 = arith.constant 0 : i32
    return %arg0, %c0_i32 : i32, i32
  }
  func.func @transform_2(%arg0: i32) -> (i32, i32) {
    %c0_i32 = arith.constant 0 : i32
    %c0_i32_0 = arith.constant 0 : i32
    return %arg0, %c0_i32 : i32, i32
  }
  func.func @transform_3(%arg0: i32) -> (i32, i32, i32) {
    %c0_i32 = arith.constant 0 : i32
    %c0_i32_0 = arith.constant 0 : i32
    %c0_i32_1 = arith.constant 0 : i32
    return %c0_i32, %arg0, %c0_i32_0 : i32, i32, i32
  }
  func.func @transform_4(%arg0: i32) -> (i32, i32) {
    %c0_i32 = arith.constant 0 : i32
    %c0_i32_0 = arith.constant 0 : i32
    return %arg0, %c0_i32 : i32, i32
  }
  func.func @transform_5(%arg0: i32) -> (i32, i32) {
    %c0_i32 = arith.constant 0 : i32
    %c0_i32_0 = arith.constant 0 : i32
    return %arg0, %c0_i32 : i32, i32
  }
}

</mosaic_0001>

<llo_original>
// kernel: tpu_custom_call.1
$region0: #{tpu_custom_call.1}
  #allocation0 [shape = 'u32[]', space=smem, size = 0x4, offset = 0x4, fixed_abs, tag = 'smem constant byte address 0x4 - core index']
  #allocation1 [shape = 'u32[72,128]{1,0:T(1,128)}', space=vmem, size = 0x9000, scoped, tag = 'internal scratch']
  %s0 = inlined_call_operand.hbm [shape: f32[2,4,256], index: 0, kind: input, shape index: {}]
  %s1 = inlined_call_operand.vmem [shape: f32[4,1], index: 1, kind: input, shape index: {}]
  %s2 = inlined_call_operand.vmem [shape: f32[4,1], index: 2, kind: input, shape index: {}]
  %s3 = inlined_call_operand.hbm [shape: f32[2,4,256], index: 3, kind: output, shape index: {0}]
  %s4 = inlined_call_operand.vmem [shape: f32[4,1], index: 4, kind: output, shape index: {1}]
  %s5 = inlined_call_operand.vmem [shape: f32[4,1], index: 5, kind: output, shape index: {2}]
  %6 = xla_tuple %s3, %s4, %s5
  %s7 = sld [smem:[#allocation0]]
  $region42: #{tpu_custom_call.1} parent=0
    _
  %s9 = ssub.s32 1, %s7
  %s10 = scalar_select 0, %s9, %s7
  $region1: #{tpu_custom_call.1} parent=0
    #allocation2 [shape = 'u8[8192]{0}', space=vmem, size = 0x2000, scoped, tag = 'input window, operand 0, single buffered']
    #allocation3 [shape = 's32[1]{0}', space=sflag, size = 0x4, scoped, tag = 'scoped memory for tpu_custom_call.1']
    #allocation4 [shape = 's32[1]{0}', space=sflag, size = 0x4, scoped, tag = 'scoped memory for tpu_custom_call.1']
    #allocation5 [shape = 'u8[8192]{0}', space=vmem, size = 0x2000, scoped, tag = 'output window, operand 0, single buffered']
    %11 = vsyncpa [#allocation3], 0
    %12 = vsyncpa [#allocation4], 0
    // Predicated region
    $region2: #{tpu_custom_call.1} parent=1 // pred_check
      _
    $region3: #{tpu_custom_call.1} parent=1 // pred_check_branch
      %14 = sbr.rel (0) target = $region5
    $region4: #{tpu_custom_call.1} parent=1 // pred_region
      %16 = vsyncadd [#allocation3], 0
      %s17 = sshll.u32 %s0, 4
      %s18 = int_to_ptr.hbm [resolvable:$true] %s17
      %s19 = sshll.u32 [#allocation2], 4
      %s20 = int_to_ptr.vmem [resolvable:$true] %s19
      %25 = dma.hbm_to_vmem [thread:$0]  %s18, 256, %s20, [#allocation3], 128, 128, 8
    $region5: #{tpu_custom_call.1} parent=1 // pred_fallthru
      _
    // Predicated region
    $region6: #{tpu_custom_call.1} parent=1 // pred_check
      _
    $region7: #{tpu_custom_call.1} parent=1 // pred_check_branch
      %27 = sbr.rel (0) target = $region9
    $region8: #{tpu_custom_call.1} parent=1 // pred_region
      _
    $region9: #{tpu_custom_call.1} parent=1 // pred_fallthru
      _
    // Predicated region
    $region10: #{tpu_custom_call.1} parent=1 // pred_check
      _
    $region11: #{tpu_custom_call.1} parent=1 // pred_check_branch
      %29 = sbr.rel (0) target = $region13
    $region12: #{tpu_custom_call.1} parent=1 // pred_region
      _
    $region13: #{tpu_custom_call.1} parent=1 // pred_fallthru
      _
    // Predicated region
    $region14: #{tpu_custom_call.1} parent=1 // pred_check
      _
    $region15: #{tpu_custom_call.1} parent=1 // pred_check_branch
      %31 = sbr.rel (0) target = $region17
    $region16: #{tpu_custom_call.1} parent=1 // pred_region
      %33 = dma.done [#allocation3], 256
    $region17: #{tpu_custom_call.1} parent=1 // pred_fallthru
      _
    %v34 = vld [vmem:[#allocation2] sm:$0xff]
    %v35 = vld [vmem:[#allocation2 + $0x8] sm:$0xff]
    %38 = vst [vmem:[#allocation1] ss:$2 sm:$0xff] %v34
    %v39 = vld.sshfl [vmem:[#allocation1] sm:$0xff pattern:$0x75316420]
    %v40 = vld.sshfl [vmem:[#allocation1 + $0x8] sm:$0xff pattern:$0x75316420]
    %s41 = scalar_lea.vmem [#allocation1], 16
    %42 = vst [vmem:[%s41] ss:$2 sm:$0xff] %v35
    %v43 = vld.sshfl [vmem:[#allocation1 + $0x10] sm:$0xff pattern:$0x75316420]
    %v44 = vld.sshfl [vmem:[#allocation1 + $0x18] sm:$0xff pattern:$0x75316420]
    %vm49 = vcmask 1043456
    %v50 = vsel %vm49, %v39, 0.0
    %v51 = vsel %vm49, %v43, 0.0
    %v52 = vadd.f32 %v50, %v51
    %v53 = vsel %vm49, %v40, 0.0
    %v54 = vsel %vm49, %v44, 0.0
    %v55 = vadd.f32 %v53, %v54
    %v56 = vsel %vm49, %v52, 0.0
    %v57 = vsel %vm49, %v55, 0.0
    %v58 = vadd.f32 %v56, %v57
    %59 = vadd.xlane.f32.xlu0 %v58
    %v60 = vpop.xlane.xlu0 %59
    %v61 = vmul.f32 %v60, 0.001953125
    %v64 = vunpack.c.l.s4 839922192
    %v65 = vunpack.c.0.s8 %v64
    %v66 = vperm.slane %v61, %v65
    %v68 = vsub.f32 %v34, %v66
    %v69 = vsub.f32 %v35, %v66
    %v70 = vmul.f32 %v68, %v68
    %v71 = vmul.f32 %v69, %v69
    %74 = vst [vmem:[#allocation1] ss:$2 sm:$0xff] %v70
    %v75 = vld.sshfl [vmem:[#allocation1] sm:$0xff pattern:$0x75316420]
    %v76 = vld.sshfl [vmem:[#allocation1 + $0x8] sm:$0xff pattern:$0x75316420]
    %s77 = scalar_lea.vmem [#allocation1], 16
    %78 = vst [vmem:[%s77] ss:$2 sm:$0xff] %v71
    %v79 = vld.sshfl [vmem:[#allocation1 + $0x10] sm:$0xff pattern:$0x75316420]
    %v80 = vld.sshfl [vmem:[#allocation1 + $0x18] sm:$0xff pattern:$0x75316420]
    %v85 = vsel %vm49, %v75, 0.0
    %v86 = vsel %vm49, %v79, 0.0
    %v87 = vadd.f32 %v85, %v86
    %v88 = vsel %vm49, %v76, 0.0
    %v89 = vsel %vm49, %v80, 0.0
    %v90 = vadd.f32 %v88, %v89
    %v91 = vsel %vm49, %v87, 0.0
    %v92 = vsel %vm49, %v90, 0.0
    %v93 = vadd.f32 %v91, %v92
    %94 = vadd.xlane.f32.xlu0 %v93
    %v95 = vpop.xlane.xlu0 %94
    %v96 = vmul.f32 %v95, 0.001953125
    %v97 = vld [vmem:[%s1] sm:$0xf]
    %v98 = vadd.f32 %v96, 1e-05
    %v99 = vrsqrt.pop %v98
    %v100 = vmul.f32 %v99, %v98
    %v101 = vmul.f32 %v100, %v99
    %v102 = vmul.f32 0.5, %v101
    %v103 = vsub.f32 1.5, %v102
    %v104 = vmul.f32 %v99, %v103
    %v105 = vmul.f32 %v98, %v104
    %vm106 = vcmp.eq.f32.partialorder %v98, inf
    %v107 = vsel %vm106, %v98, %v105
    %vm108 = vcmp.eq.f32.partialorder %v98, 0.0
    %v109 = vand.u32 %v98, 2147483648
    %v110 = vsel %vm108, %v109, %v107
    %v111 = vrcp.pop %v110
    %v112 = vmul.f32 %v110, %v111
    %v113 = vsub.f32 1.0, %v112
    %v114 = vmul.f32 %v111, %v113
    %v115 = vadd.f32 %v111, %v114
    %vm116 = vweird.f32 %v110
    %vm117 = vweird.f32 %v111
    %vm118 = vmor %vm116, %vm117
    %v119 = vsel %vm118, %v111, %v115
    %v120 = vand.u32 2147483647, %v110
    %vm121 = vcmp.eq.f32.partialorder %v120, 8.507059e+37
    %v122 = vand.u32 %v110, 2147483648
    %v123 = vor.u32 1.1754944e-38, %v122
    %v124 = vsel %vm121, %v123, %v119
    %v125 = vmul.f32 %v97, %v124
    %127 = vset.pattern.permute.xlu0 0
    %128 = vperm.xlu0 %127, %v125
    %v129 = vpop.permute.xlu0 %128
    %v131 = vunpack.c.l.s4 839922192
    %v132 = vunpack.c.0.s8 %v131
    %v133 = vperm.slane %v129, %v132
    %v135 = vmul.f32 %v68, %v133
    %v136 = vmul.f32 %v69, %v133
    %v137 = vld [vmem:[%s2] sm:$0xf]
    %139 = vset.pattern.permute.xlu0 0
    %140 = vperm.xlu0 %139, %v137
    %v141 = vpop.permute.xlu0 %140
    %v143 = vunpack.c.l.s4 839922192
    %v144 = vunpack.c.0.s8 %v143
    %v145 = vperm.slane %v141, %v144
    %v147 = vadd.f32 %v135, %v145
    %v148 = vadd.f32 %v136, %v145
    %149 = vst [vmem:[#allocation5] sm:$0xff] %v147
    %150 = vst [vmem:[#allocation5 + $0x8] sm:$0xff] %v148
    %vm151 = vcmask 3072
    %152 = vst.msk [vmem:[%s4] sm:$0xf] %vm151, %v61
    %153 = vst.msk [vmem:[%s5] sm:$0xf] %vm151, %v96
    // Predicated region
    $region18: #{tpu_custom_call.1} parent=1 // pred_check
      _
    $region19: #{tpu_custom_call.1} parent=1 // pred_check_branch
      %155 = sbr.rel (0) target = $region21
    $region20: #{tpu_custom_call.1} parent=1 // pred_region
      %157 = vsyncadd [#allocation4], 0
      %s158 = sshll.u32 [#allocation5], 4
      %s159 = int_to_ptr.vmem [resolvable:$true] %s158
      %s160 = sshll.u32 %s3, 4
      %s161 = int_to_ptr.hbm [resolvable:$true] %s160
      %166 = dma.vmem_to_hbm [thread:$0]  %s159, 256, %s161, [#allocation4], 128, 128, 8
    $region21: #{tpu_custom_call.1} parent=1 // pred_fallthru
      _
    // Predicated region
    $region22: #{tpu_custom_call.1} parent=1 // pred_check
      _
    $region23: #{tpu_custom_call.1} parent=1 // pred_check_branch
      %168 = sbr.rel (0) target = $region25
    $region24: #{tpu_custom_call.1} parent=1 // pred_region
      _
    $region25: #{tpu_custom_call.1} parent=1 // pred_fallthru
      _
    // Predicated region
    $region26: #{tpu_custom_call.1} parent=1 // pred_check
      _
    $region27: #{tpu_custom_call.1} parent=1 // pred_check_branch
      %170 = sbr.rel (0) target = $region29
    $region28: #{tpu_custom_call.1} parent=1 // pred_region
      _
    $region29: #{tpu_custom_call.1} parent=1 // pred_fallthru
      _
    // Predicated region
    $region30: #{tpu_custom_call.1} parent=1 // pred_check
      _
    $region31: #{tpu_custom_call.1} parent=1 // pred_check_branch
      %172 = sbr.rel (0) target = $region33
    $region32: #{tpu_custom_call.1} parent=1 // pred_region
      %174 = dma.done [#allocation4], 256
    $region33: #{tpu_custom_call.1} parent=1 // pred_fallthru
      _
    // Predicated region
    $region34: #{tpu_custom_call.1} parent=1 // pred_check
      _
    $region35: #{tpu_custom_call.1} parent=1 // pred_check_branch
      %176 = sbr.rel (0) target = $region37
    $region36: #{tpu_custom_call.1} parent=1 // pred_region
      _
    $region37: #{tpu_custom_call.1} parent=1 // pred_fallthru
      _
    // Predicated region
    $region38: #{tpu_custom_call.1} parent=1 // pred_check
      _
    $region39: #{tpu_custom_call.1} parent=1 // pred_check_branch
      %178 = sbr.rel (0) target = $region41
    $region40: #{tpu_custom_call.1} parent=1 // pred_region
      _
    $region41: #{tpu_custom_call.1} parent=1 // pred_fallthru
      _
    %179 = vsyncpa [#allocation3], 1
    %180 = vsyncpa [#allocation4], 1

</llo_original>
